<compile_context>
chip_gen: v7x
topology: tpu7x:2x2x1
jax: 0.10.0
libtpu: 0.0.40
codegen_flags: <defaults>
</compile_context>

<pallas_src>
import functools

import jax
import jax.numpy as jnp
from jax.experimental import pallas as pl
from jax.experimental.pallas import tpu as pltpu

LANES = 128      # pad #tasks up to one lane-row
SUBLANES = 8     # f32 sublane tile -> one (8,128) vreg slab


def _mtl_loss_kernel(packed_ref, out_ref, *, k_active):
    x = packed_ref[...]              # (8, LANES) f32, single vreg-aligned load
    loss = x[0:1, :]                 # (1, LANES) per-task losses
    sigma = x[1:2, :]                # (1, LANES) per-task sigmas (padded lanes = 0)

    # Compile-time active-lane mask (k_active is a Python int baked at trace).
    lane = jax.lax.broadcasted_iota(jnp.int32, (1, LANES), 1)
    active = lane < k_active

    # Sanitize padded sigma lanes BEFORE divide/log so no 0/0 or log(0) appears.
    sigma_safe = jnp.where(active, sigma, 1.0)

    inv_var = pl.reciprocal(sigma_safe * sigma_safe, approx=False)
    term = 0.5 * loss * inv_var + 3.0 * jnp.log(sigma_safe)
    term = jnp.where(active, term, 0.0)

    out_ref[0, 0] = jnp.sum(term)    # scalar -> SMEM output


def mtl_loss(loss_dict, sigma_dict, lw):
    """Pallas equivalent of MTL_loss.forward.

    loss_dict:  {key: scalar f32 jnp array} per-task losses
    sigma_dict: {key: scalar f32 jnp array} learned sigmas (only keys with lw>0)
    lw:         {key: float} loss weights (tasks with lw<=0 are skipped)

    NOTE: at ~400 FLOPs this op is fixed-overhead bound; in production it
    should be fused into the graph producing the per-task losses rather than
    run as a standalone pallas_call.  Kept standalone here per the spec.
    """
    active_keys = [k for k in sigma_dict.keys() if lw[k] > 0]
    k_active = len(active_keys)
    assert 0 < k_active <= LANES

    loss_vec = jnp.stack([jnp.asarray(loss_dict[k], jnp.float32).reshape(())
                          for k in active_keys])
    sigma_vec = jnp.stack([jnp.asarray(sigma_dict[k], jnp.float32).reshape(())
                           for k in active_keys])

    # One (8, LANES) tile: row 0 = losses, row 1 = sigmas, rest zero padding.
    packed = jnp.pad(jnp.stack([loss_vec, sigma_vec]),
                     ((0, SUBLANES - 2), (0, LANES - k_active)))

    out = pl.pallas_call(
        functools.partial(_mtl_loss_kernel, k_active=k_active),
        out_shape=jax.ShapeDtypeStruct((1, 1), jnp.float32),
        in_specs=[pl.BlockSpec((SUBLANES, LANES), lambda: (0, 0))],
        out_specs=pl.BlockSpec(memory_space=pltpu.SMEM),
    )(packed)

    # PyTorch forward returns shape (1,) (scalar loss broadcast with (1,) sigma).
    return out.reshape((1,))


if __name__ == "__main__":
    key = jax.random.PRNGKey(0)

    # Task weights (set_dict); one task with weight 0 to exercise the filter.
    lw = {"depth": 1.0, "seg": 0.5, "normal": 2.0, "edge": 0.0}

    # sigmas are initialized to torch.ones(1) * lw[k] for lw[k] > 0.
    sigma_dict = {k: jnp.full((1,), v, jnp.float32) for k, v in lw.items() if v > 0}

    # Deterministic synthetic per-task scalar losses (always positive).
    all_keys = sorted(lw.keys())
    raw = jax.random.uniform(key, (len(all_keys),), jnp.float32, 0.1, 2.0)
    loss_dict = {k: raw[i] for i, k in enumerate(all_keys)}

    result = mtl_loss(loss_dict, sigma_dict, lw)
    result = jax.block_until_ready(result)

    # Pure-JAX reference check.
    ref = jnp.zeros((1,), jnp.float32)
    for k in sigma_dict.keys():
        if lw[k] > 0:
            s = sigma_dict[k]
            ref = ref + 0.5 * loss_dict[k] / (s ** 2) + 3.0 * jnp.log(s)

    assert jnp.allclose(result, ref, rtol=1e-5, atol=1e-5), (result, ref)
    print("KERNEL_OK")
</pallas_src>

<mosaic_0001>
module attributes {stable_mosaic.version = 11 : i64} {
  func.func @_mtl_loss_kernel(%arg0: memref<8x128xf32, #tpu.memory_space<vmem>>, %arg1: memref<1x1xf32, #tpu.memory_space<smem>>) attributes {dimension_semantics = [], scalar_prefetch = 0 : i64, scratch_operands = 0 : i64, tpu.core_type = #tpu.core_type<tc>} {
    %c0 = arith.constant 0 : index
    %c0_0 = arith.constant 0 : index
    %0 = vector.load %arg0[%c0, %c0_0] : memref<8x128xf32, #tpu.memory_space<vmem>>, vector<8x128xf32>
    %1 = vector.extract_strided_slice %0 {offsets = [0, 0], sizes = [1, 128], strides = [1, 1]} : vector<8x128xf32> to vector<1x128xf32>
    %2 = vector.extract_strided_slice %0 {offsets = [1, 0], sizes = [1, 128], strides = [1, 1]} : vector<8x128xf32> to vector<1x128xf32>
    %3 = tpu.iota {dimensions = array<i32: 1>} : vector<1x128xi32>
    %c3_i32 = arith.constant 3 : i32
    %4 = vector.broadcast %c3_i32 : i32 to vector<1x128xi32>
    %5 = arith.cmpi slt, %3, %4 : vector<1x128xi32>
    %cst = arith.constant 1.000000e+00 : f32
    %6 = vector.broadcast %cst : f32 to vector<1x128xf32>
    %7 = arith.select %5, %2, %6 : vector<1x128xi1>, vector<1x128xf32>
    %8 = arith.mulf %7, %7 : vector<1x128xf32>
    %9 = tpu.reciprocal %8 : vector<1x128xf32> -> vector<1x128xf32>
    %cst_1 = arith.constant 5.000000e-01 : f32
    %10 = vector.broadcast %cst_1 : f32 to vector<1x128xf32>
    %11 = arith.mulf %10, %1 : vector<1x128xf32>
    %12 = arith.mulf %11, %9 : vector<1x128xf32>
    %13 = math.log %7 : vector<1x128xf32>
    %cst_2 = arith.constant 3.000000e+00 : f32
    %14 = vector.broadcast %cst_2 : f32 to vector<1x128xf32>
    %15 = arith.mulf %14, %13 : vector<1x128xf32>
    %16 = arith.addf %12, %15 : vector<1x128xf32>
    %cst_3 = arith.constant 0.000000e+00 : f32
    %17 = vector.broadcast %cst_3 : f32 to vector<1x128xf32>
    %18 = arith.select %5, %16, %17 : vector<1x128xi1>, vector<1x128xf32>
    %19 = vector.shape_cast %18 : vector<1x128xf32> to vector<1x1x128xf32>
    %cst_4 = arith.constant dense<0.000000e+00> : vector<1xf32>
    %20 = vector.multi_reduction <add>, %19, %cst_4 [1, 2] : vector<1x1x128xf32> to vector<1xf32>
    %21 = vector.shape_cast %20 : vector<1xf32> to vector<1x1x1xf32>
    %22 = vector.extract %21[0, 0, 0] : f32 from vector<1x1x1xf32>
    %c0_5 = arith.constant 0 : index
    %c0_6 = arith.constant 0 : index
    %23 = memref.load %arg1[%c0_5, %c0_6] : memref<1x1xf32, #tpu.memory_space<smem>>
    memref.store %22, %arg1[%c0_5, %c0_6] : memref<1x1xf32, #tpu.memory_space<smem>>
    return
  }
}

</mosaic_0001>

<llo_original>
// kernel: tpu_custom_call.1
$region0: #{tpu_custom_call.1}
  #allocation0 [shape = 'u32[]', space=smem, size = 0x4, offset = 0x4, fixed_abs, tag = 'smem constant byte address 0x4 - core index']
  #allocation1 [shape = 'u32[144,128]{1,0:T(1,128)}', space=vmem, size = 0x12000, scoped, tag = 'internal scratch']
  %s0 = inlined_call_operand.hbm [shape: f32[8,128], index: 0, kind: input, shape index: {}]
  %s1 = inlined_call_operand.hbm [shape: f32[1,1], index: 1, kind: output, shape index: {}]
  %s2 = sld [smem:[#allocation0]]
  $region18: #{tpu_custom_call.1} parent=0
    _
  %s4 = ssub.s32 1, %s2
  %s5 = scalar_select 0, %s4, %s2
  $region1: #{tpu_custom_call.1} parent=0
    #allocation2 [shape = 'u8[4096]{0}', space=vmem, size = 0x1000, scoped, tag = 'input window, operand 0, single buffered']
    #allocation3 [shape = 's32[1]{0}', space=sflag, size = 0x4, scoped, tag = 'scoped memory for tpu_custom_call.1']
    #allocation4 [shape = 's32[1]{0}', space=sflag, size = 0x4, scoped, tag = 'scoped memory for tpu_custom_call.1']
    #allocation5 [shape = 'u8[512]{0}', space=smem, size = 0x200, scoped, tag = 'output window, operand 0, single buffered']
    %6 = vsyncpa [#allocation3], 0
    %7 = vsyncpa [#allocation4], 0
    // Predicated region
    $region2: #{tpu_custom_call.1} parent=1 // pred_check
      _
    $region3: #{tpu_custom_call.1} parent=1 // pred_check_branch
      %9 = sbr.rel (0) target = $region5
    $region4: #{tpu_custom_call.1} parent=1 // pred_region
      %s11 = ssub.s32 128, 128
      %12 = vsyncadd [#allocation3], %s11
      %s14 = sshll.u32 [#allocation2], 4
      %s15 = int_to_ptr.vmem [resolvable:$true] %s14
      %17 = dma.hbm_to_vmem [thread:$0]  %s0, 128, %s15, [#allocation3]
    $region5: #{tpu_custom_call.1} parent=1 // pred_fallthru
      _
    // Predicated region
    $region6: #{tpu_custom_call.1} parent=1 // pred_check
      _
    $region7: #{tpu_custom_call.1} parent=1 // pred_check_branch
      %19 = sbr.rel (0) target = $region9
    $region8: #{tpu_custom_call.1} parent=1 // pred_region
      %20 = dma.done [#allocation3], 128
    $region9: #{tpu_custom_call.1} parent=1 // pred_fallthru
      _
    %v21 = vld [vmem:[#allocation2] sm:$0xff]
    %v22 = vlaneseq
    %v23 = vand.u32 %v22, 127
    %vm24 = vcmp.lt.s32.totalorder %v23, 3
    %v25 = vsel %vm24, %v21, 1.0
    %v26 = vmul.f32 %v25, %v25
    %v27 = vrcp.pop %v26
    %v28 = vmul.f32 %v21, 0.5
    %v30 = vrot.slane %v27, 1
    %v32 = vmul.f32 %v28, %v30
    %v33 = vlog2.pop %v25
    %v34 = vmul.f32 %v33, 0.6931472
    %v35 = vmul.f32 %v34, 3.0
    %v37 = vrot.slane %v35, 1
    %v39 = vadd.f32 %v32, %v37
    %v40 = vsel %vm24, %v39, 0.0
    %vm41 = vcmask 1040384
    %v42 = vsel %vm41, %v40, 0.0
    %43 = vadd.xlane.f32.xlu0 %v42
    %v44 = vpop.xlane.xlu0 %43
    %v45 = vrot.slane %v44, 4
    %v46 = vadd.f32 %v44, %v45
    %v47 = vrot.slane %v46, 2
    %v48 = vadd.f32 %v46, %v47
    %v49 = vrot.slane %v48, 1
    %v50 = vadd.f32 %v48, %v49
    %s51 = vtos %v50
    %s52 = scalar_lea.smem [#allocation5], 0
    %53 = sst [smem:[%s52]] %s51
    // Predicated region
    $region10: #{tpu_custom_call.1} parent=1 // pred_check
      _
    $region11: #{tpu_custom_call.1} parent=1 // pred_check_branch
      %55 = sbr.rel (0) target = $region13
    $region12: #{tpu_custom_call.1} parent=1 // pred_region
      %s57 = ssub.s32 16, 16
      %58 = vsyncadd [#allocation4], %s57
      %61 = dma.smem_to_hbm [#allocation5], 16, %s1, [#allocation4]
    $region13: #{tpu_custom_call.1} parent=1 // pred_fallthru
      _
    // Predicated region
    $region14: #{tpu_custom_call.1} parent=1 // pred_check
      _
    $region15: #{tpu_custom_call.1} parent=1 // pred_check_branch
      %63 = sbr.rel (0) target = $region17
    $region16: #{tpu_custom_call.1} parent=1 // pred_region
      %64 = dma.done [#allocation4], 16
    $region17: #{tpu_custom_call.1} parent=1 // pred_fallthru
      _
    %65 = sfence
    %66 = vsyncpa [#allocation3], 1
    %67 = vsyncpa [#allocation4], 1

</llo_original>
